<compile_context>
chip_gen: v7x
topology: tpu7x:2x2x1
jax: 0.10.0
libtpu: 0.0.40
codegen_flags: <defaults>
</compile_context>

<pallas_src>
import math
import functools

import jax
import jax.numpy as jnp
from jax.experimental import pallas as pl
from jax.experimental.pallas import tpu as pltpu


def _compress_kernel(ts_ref, mem_ref, zt_ref, at_ref, zs_ref,
                     ts_norm, z_acc, a_acc, *, inv_T, batch):
    """One (slice, queue-chunk) grid step.

    ts_ref   : (2B, D) stacked [teacher; student] features (constant block).
    mem_ref  : (D, q_chunk) transposed memory-bank chunk.
    zt/at/zs : (1, B, 1) per-slice partial sums (written on the last chunk).
    ts_norm  : (2B, D) VMEM scratch: normalized features pre-scaled by 1/T.
    z_acc    : (2B, 1) running sum of exp(sim - 1/T) (teacher rows, student rows).
    a_acc    : (B, 1)  running sum of exp(sim_t - 1/T) * (sim_t - sim_s).
    """
    q = pl.program_id(1)

    # Hoisted (once per slice): L2 normalization + fold in 1/T, reset accums.
    @pl.when(q == 0)
    def _():
        ts = ts_ref[...].astype(jnp.float32)
        ts = ts / jnp.sqrt(jnp.sum(ts * ts, axis=1, keepdims=True))
        ts_norm[...] = (ts * inv_T).astype(ts_norm.dtype)
        z_acc[...] = jnp.zeros_like(z_acc)
        a_acc[...] = jnp.zeros_like(a_acc)

    # Single MXU pass serves both teacher and student similarities.
    sim = jnp.dot(ts_norm[...], mem_ref[...],
                  preferred_element_type=jnp.float32)        # (2B, q_chunk)

    # Static shift S = 1/T instead of an online max: normalized features and
    # ~unit-norm bank rows keep exp(sim - S) <= ~1, and the sum over Q stays
    # comfortably inside f32 range, so plain accumulation is safe.
    e = jnp.exp(sim - inv_T)                                  # (2B, q_chunk)
    z_acc[...] += jnp.sum(e, axis=-1, keepdims=True)

    diff = sim[:batch] - sim[batch:]                          # (B, q_chunk)
    a_acc[...] += jnp.sum(e[:batch] * diff, axis=-1, keepdims=True)

    @pl.when(q == pl.num_programs(1) - 1)
    def _():
        zz = z_acc[...]
        zt_ref[0] = zz[:batch]        # teacher partition function (partial)
        at_ref[0] = a_acc[...]        # KL numerator (partial)
        zs_ref[0] = zz[batch:]        # student partition function (partial)


def compress_a_loss(teacher_feats, student_feats, memory, *, T=0.04,
                    q_chunk=8192, num_slices=2, compute_dtype=jnp.bfloat16):
    """CompReSSA.forward (loss only).

    teacher_feats, student_feats: (B, D); memory: (Q, D) as stored by the
    PyTorch module (it is transposed/cast here; a real training loop would
    keep the bank persistently in (D, Q) layout).
    B should preferably be a multiple of 8 for clean sublane slicing.

    # TODO(synk): the PyTorch module also index_copy_'s the (normalized)
    # teacher features into the memory bank (stateful queue update). The loss
    # uses the pre-update clone, so the forward value is unaffected; the
    # in-place buffer update is not reproduced here.
    """
    B, D = teacher_feats.shape
    Q, D2 = memory.shape
    assert D == D2
    q_chunk = min(q_chunk, Q)
    assert Q % q_chunk == 0 and q_chunk % 128 == 0
    num_chunks = Q // q_chunk
    if num_chunks % num_slices != 0:
        num_slices = 1
    cps = num_chunks // num_slices          # chunks per slice
    inv_T = 1.0 / T

    # Stack [teacher; student] so each memory chunk crosses the MXU once.
    ts = jnp.concatenate([teacher_feats, student_feats], axis=0)   # (2B, D)
    # Lane-dense transposed bank, streamed in compute_dtype (bf16 by default).
    mem_t = memory.T.astype(compute_dtype)                         # (D, Q)

    kernel = functools.partial(_compress_kernel, inv_T=inv_T, batch=B)

    out_struct = jax.ShapeDtypeStruct((num_slices, B, 1), jnp.float32)
    part_spec = pl.BlockSpec((1, B, 1), lambda c, q: (c, 0, 0))

    zt, at, zs = pl.pallas_call(
        kernel,
        out_shape=(out_struct, out_struct, out_struct),
        grid_spec=pltpu.PrefetchScalarGridSpec(
            num_scalar_prefetch=0,
            grid=(num_slices, cps),
            in_specs=[
                # stacked features: fetched once (constant block index)
                pl.BlockSpec((2 * B, D), lambda c, q: (0, 0)),
                # streamed memory-bank chunk (double-buffered by Pallas;
                # pipeline_mode=pl.Buffered(3) is an option if DMA is exposed)
                pl.BlockSpec((D, q_chunk), lambda c, q: (0, c * cps + q)),
            ],
            out_specs=[part_spec, part_spec, part_spec],
            scratch_shapes=[
                pltpu.VMEM((2 * B, D), compute_dtype),   # normalized * 1/T
                pltpu.VMEM((2 * B, 1), jnp.float32),     # z accumulators
                pltpu.VMEM((B, 1), jnp.float32),         # KL numerator accum
            ],
        ),
        compiler_params=pltpu.CompilerParams(
            dimension_semantics=("parallel", "arbitrary"),
            vmem_limit_bytes=64 * 1024 * 1024),
    )(ts, mem_t)

    # Tiny JAX epilogue: combine per-slice partials, finish the KL algebra.
    z_t = jnp.sum(zt[..., 0], axis=0)        # (B,)
    a_t = jnp.sum(at[..., 0], axis=0)
    z_s = jnp.sum(zs[..., 0], axis=0)
    # Per-row KL = a_t/z_t - lse_t + lse_s ; the static shift cancels.
    kl = a_t / z_t - jnp.log(z_t) + jnp.log(z_s)
    return jnp.sum(kl) / B                   # kl_div(reduction='batchmean')


def _reference_loss(t, s, mem, T):
    """Pure-JAX replica of the PyTorch module's forward."""
    t = t / jnp.sqrt(jnp.sum(t * t, axis=1, keepdims=True))
    s = s / jnp.sqrt(jnp.sum(s * s, axis=1, keepdims=True))
    sim_t = (t @ mem.T) / T
    sim_s = (s @ mem.T) / T
    p_t = jax.nn.softmax(sim_t, axis=1)
    kl = p_t * (jax.nn.log_softmax(sim_t, axis=1)
                - jax.nn.log_softmax(sim_s, axis=1))
    return jnp.sum(kl) / t.shape[0]


if __name__ == "__main__":
    B, D = 8, 32          # batch, feature dim
    Q = 4096              # small stand-in for the 65536-entry memory bank
    T = 0.04              # temperature from the module

    key = jax.random.PRNGKey(0)
    k1, k2, k3 = jax.random.split(key, 3)
    teacher = jax.random.normal(k1, (B, D), dtype=jnp.float32)
    student = jax.random.normal(k2, (B, D), dtype=jnp.float32)
    # memory bank init: uniform in [-stdv, stdv], stdv = 1/sqrt(D/3)
    stdv = 1.0 / math.sqrt(D / 3)
    memory = jax.random.uniform(k3, (Q, D), dtype=jnp.float32,
                                minval=-stdv, maxval=stdv)

    ref = _reference_loss(teacher, student, memory, T)

    # Full-precision run: matches the PyTorch module semantics tightly.
    loss_f32 = compress_a_loss(teacher, student, memory, T=T, q_chunk=1024,
                               num_slices=2, compute_dtype=jnp.float32)
    loss_f32 = jax.block_until_ready(loss_f32)
    assert jnp.allclose(loss_f32, ref, rtol=2e-3, atol=1e-4), (loss_f32, ref)

    # Default bf16-streamed bank (production config): looser tolerance.
    loss_bf16 = compress_a_loss(teacher, student, memory, T=T, q_chunk=1024,
                                num_slices=2, compute_dtype=jnp.bfloat16)
    loss_bf16 = jax.block_until_ready(loss_bf16)
    assert jnp.allclose(loss_bf16, ref, rtol=1e-1, atol=1e-1), (loss_bf16, ref)

    print("KERNEL_OK")
</pallas_src>

<mosaic_0001>
module attributes {stable_mosaic.version = 11 : i64} {
  func.func @_compress_kernel(%arg0: i32, %arg1: i32, %arg2: memref<16x32xf32, #tpu.memory_space<vmem>>, %arg3: memref<32x1024xf32, #tpu.memory_space<vmem>>, %arg4: memref<1x8x1xf32, #tpu.memory_space<vmem>>, %arg5: memref<1x8x1xf32, #tpu.memory_space<vmem>>, %arg6: memref<1x8x1xf32, #tpu.memory_space<vmem>>, %arg7: memref<16x32xf32, #tpu.memory_space<vmem>>, %arg8: memref<16x1xf32, #tpu.memory_space<vmem>>, %arg9: memref<8x1xf32, #tpu.memory_space<vmem>>) attributes {dimension_semantics = [#tpu.dimension_semantics<parallel>, #tpu.dimension_semantics<arbitrary>], iteration_bounds = array<i64: 2, 2>, scalar_prefetch = 0 : i64, scratch_operands = 3 : i64, tpu.core_type = #tpu.core_type<tc>, window_params = [{pipeline_mode = #tpu.pipeline_mode<synchronous>, transform_indices = @transform_0, window_bounds = array<i64: 16, 32>}, {transform_indices = @transform_1, window_bounds = array<i64: 32, 1024>}, {transform_indices = @transform_2, window_bounds = array<i64: 1, 8, 1>}, {transform_indices = @transform_3, window_bounds = array<i64: 1, 8, 1>}, {transform_indices = @transform_4, window_bounds = array<i64: 1, 8, 1>}]} {
    %c0_i32 = arith.constant 0 : i32
    %0 = arith.cmpi eq, %arg1, %c0_i32 : i32
    %1 = arith.extui %0 : i1 to i32
    %c0_i32_0 = arith.constant 0 : i32
    %2 = arith.cmpi ne, %1, %c0_i32_0 : i32
    scf.if %2 {
      %c0_16 = arith.constant 0 : index
      %c0_17 = arith.constant 0 : index
      %27 = vector.load %arg2[%c0_16, %c0_17] : memref<16x32xf32, #tpu.memory_space<vmem>>, vector<16x32xf32>
      %28 = arith.mulf %27, %27 : vector<16x32xf32>
      %cst_18 = arith.constant dense<0.000000e+00> : vector<16xf32>
      %29 = vector.multi_reduction <add>, %28, %cst_18 [1] : vector<16x32xf32> to vector<16xf32>
      %30 = vector.shape_cast %29 : vector<16xf32> to vector<16x1xf32>
      %31 = math.sqrt %30 : vector<16x1xf32>
      %32 = vector.broadcast %31 : vector<16x1xf32> to vector<16x32xf32>
      %33 = arith.divf %27, %32 : vector<16x32xf32>
      %cst_19 = arith.constant 2.500000e+01 : f32
      %34 = vector.broadcast %cst_19 : f32 to vector<16x32xf32>
      %35 = arith.mulf %33, %34 : vector<16x32xf32>
      %c0_20 = arith.constant 0 : index
      %c0_21 = arith.constant 0 : index
      %36 = vector.load %arg7[%c0_20, %c0_21] : memref<16x32xf32, #tpu.memory_space<vmem>>, vector<16x32xf32>
      tpu.vector_store %arg7[%c0_20, %c0_21], %35 {strides = array<i32>} : memref<16x32xf32, #tpu.memory_space<vmem>>, vector<16x32xf32>,
      %cst_22 = arith.constant 0.000000e+00 : f32
      %37 = vector.broadcast %cst_22 : f32 to vector<16x1xf32>
      %c0_23 = arith.constant 0 : index
      %c0_24 = arith.constant 0 : index
      %38 = vector.load %arg8[%c0_23, %c0_24] : memref<16x1xf32, #tpu.memory_space<vmem>>, vector<16x1xf32>
      tpu.vector_store %arg8[%c0_23, %c0_24], %37 {strides = array<i32>} : memref<16x1xf32, #tpu.memory_space<vmem>>, vector<16x1xf32>,
      %cst_25 = arith.constant 0.000000e+00 : f32
      %39 = vector.broadcast %cst_25 : f32 to vector<8x1xf32>
      %c0_26 = arith.constant 0 : index
      %c0_27 = arith.constant 0 : index
      %40 = vector.load %arg9[%c0_26, %c0_27] : memref<8x1xf32, #tpu.memory_space<vmem>>, vector<8x1xf32>
      tpu.vector_store %arg9[%c0_26, %c0_27], %39 {strides = array<i32>} : memref<8x1xf32, #tpu.memory_space<vmem>>, vector<8x1xf32>,
    } else {
    }
    %c0 = arith.constant 0 : index
    %c0_1 = arith.constant 0 : index
    %3 = vector.load %arg7[%c0, %c0_1] : memref<16x32xf32, #tpu.memory_space<vmem>>, vector<16x32xf32>
    %c0_2 = arith.constant 0 : index
    %c0_3 = arith.constant 0 : index
    %4 = vector.load %arg3[%c0_2, %c0_3] : memref<32x1024xf32, #tpu.memory_space<vmem>>, vector<32x1024xf32>
    %cst = arith.constant dense<0.000000e+00> : vector<16x1024xf32>
    %5 = tpu.matmul %3, %4, %cst {dimension_numbers = #tpu.dot_dimension_numbers<[1], [0], [0], [1], [0, 0, 1, 1], [], []>} : vector<16x32xf32>, vector<32x1024xf32>, vector<16x1024xf32> -> vector<16x1024xf32>
    %cst_4 = arith.constant 2.500000e+01 : f32
    %6 = vector.broadcast %cst_4 : f32 to vector<16x1024xf32>
    %7 = arith.subf %5, %6 : vector<16x1024xf32>
    %8 = math.exp %7 : vector<16x1024xf32>
    %c0_5 = arith.constant 0 : index
    %c0_6 = arith.constant 0 : index
    %9 = vector.load %arg8[%c0_5, %c0_6] : memref<16x1xf32, #tpu.memory_space<vmem>>, vector<16x1xf32>
    %cst_7 = arith.constant dense<0.000000e+00> : vector<16xf32>
    %10 = vector.multi_reduction <add>, %8, %cst_7 [1] : vector<16x1024xf32> to vector<16xf32>
    %11 = vector.shape_cast %10 : vector<16xf32> to vector<16x1xf32>
    %12 = arith.addf %9, %11 : vector<16x1xf32>
    %c0_8 = arith.constant 0 : index
    %c0_9 = arith.constant 0 : index
    %13 = vector.load %arg8[%c0_8, %c0_9] : memref<16x1xf32, #tpu.memory_space<vmem>>, vector<16x1xf32>
    tpu.vector_store %arg8[%c0_8, %c0_9], %12 {strides = array<i32>} : memref<16x1xf32, #tpu.memory_space<vmem>>, vector<16x1xf32>,
    %14 = vector.extract_strided_slice %5 {offsets = [0, 0], sizes = [8, 1024], strides = [1, 1]} : vector<16x1024xf32> to vector<8x1024xf32>
    %15 = vector.extract_strided_slice %5 {offsets = [8, 0], sizes = [8, 1024], strides = [1, 1]} : vector<16x1024xf32> to vector<8x1024xf32>
    %16 = arith.subf %14, %15 : vector<8x1024xf32>
    %c0_10 = arith.constant 0 : index
    %c0_11 = arith.constant 0 : index
    %17 = vector.load %arg9[%c0_10, %c0_11] : memref<8x1xf32, #tpu.memory_space<vmem>>, vector<8x1xf32>
    %18 = vector.extract_strided_slice %8 {offsets = [0, 0], sizes = [8, 1024], strides = [1, 1]} : vector<16x1024xf32> to vector<8x1024xf32>
    %19 = arith.mulf %18, %16 : vector<8x1024xf32>
    %cst_12 = arith.constant dense<0.000000e+00> : vector<8xf32>
    %20 = vector.multi_reduction <add>, %19, %cst_12 [1] : vector<8x1024xf32> to vector<8xf32>
    %21 = vector.shape_cast %20 : vector<8xf32> to vector<8x1xf32>
    %22 = arith.addf %17, %21 : vector<8x1xf32>
    %c0_13 = arith.constant 0 : index
    %c0_14 = arith.constant 0 : index
    %23 = vector.load %arg9[%c0_13, %c0_14] : memref<8x1xf32, #tpu.memory_space<vmem>>, vector<8x1xf32>
    tpu.vector_store %arg9[%c0_13, %c0_14], %22 {strides = array<i32>} : memref<8x1xf32, #tpu.memory_space<vmem>>, vector<8x1xf32>,
    %c1_i32 = arith.constant 1 : i32
    %24 = arith.cmpi eq, %arg1, %c1_i32 : i32
    %25 = arith.extui %24 : i1 to i32
    %c0_i32_15 = arith.constant 0 : i32
    %26 = arith.cmpi ne, %25, %c0_i32_15 : i32
    scf.if %26 {
      %c0_16 = arith.constant 0 : index
      %c0_17 = arith.constant 0 : index
      %27 = vector.load %arg8[%c0_16, %c0_17] : memref<16x1xf32, #tpu.memory_space<vmem>>, vector<16x1xf32>
      %28 = vector.extract_strided_slice %27 {offsets = [0, 0], sizes = [8, 1], strides = [1, 1]} : vector<16x1xf32> to vector<8x1xf32>
      %c0_18 = arith.constant 0 : index
      %c0_19 = arith.constant 0 : index
      %c0_20 = arith.constant 0 : index
      %29 = vector.load %arg4[%c0_18, %c0_19, %c0_20] : memref<1x8x1xf32, #tpu.memory_space<vmem>>, vector<1x8x1xf32>
      %30 = vector.shape_cast %29 : vector<1x8x1xf32> to vector<8x1xf32>
      %31 = vector.shape_cast %28 : vector<8x1xf32> to vector<1x8x1xf32>
      tpu.vector_store %arg4[%c0_18, %c0_19, %c0_20], %31 {strides = array<i32>} : memref<1x8x1xf32, #tpu.memory_space<vmem>>, vector<1x8x1xf32>,
      %c0_21 = arith.constant 0 : index
      %c0_22 = arith.constant 0 : index
      %32 = vector.load %arg9[%c0_21, %c0_22] : memref<8x1xf32, #tpu.memory_space<vmem>>, vector<8x1xf32>
      %c0_23 = arith.constant 0 : index
      %c0_24 = arith.constant 0 : index
      %c0_25 = arith.constant 0 : index
      %33 = vector.load %arg5[%c0_23, %c0_24, %c0_25] : memref<1x8x1xf32, #tpu.memory_space<vmem>>, vector<1x8x1xf32>
      %34 = vector.shape_cast %33 : vector<1x8x1xf32> to vector<8x1xf32>
      %35 = vector.shape_cast %32 : vector<8x1xf32> to vector<1x8x1xf32>
      tpu.vector_store %arg5[%c0_23, %c0_24, %c0_25], %35 {strides = array<i32>} : memref<1x8x1xf32, #tpu.memory_space<vmem>>, vector<1x8x1xf32>,
      %36 = vector.extract_strided_slice %27 {offsets = [8, 0], sizes = [8, 1], strides = [1, 1]} : vector<16x1xf32> to vector<8x1xf32>
      %c0_26 = arith.constant 0 : index
      %c0_27 = arith.constant 0 : index
      %c0_28 = arith.constant 0 : index
      %37 = vector.load %arg6[%c0_26, %c0_27, %c0_28] : memref<1x8x1xf32, #tpu.memory_space<vmem>>, vector<1x8x1xf32>
      %38 = vector.shape_cast %37 : vector<1x8x1xf32> to vector<8x1xf32>
      %39 = vector.shape_cast %36 : vector<8x1xf32> to vector<1x8x1xf32>
      tpu.vector_store %arg6[%c0_26, %c0_27, %c0_28], %39 {strides = array<i32>} : memref<1x8x1xf32, #tpu.memory_space<vmem>>, vector<1x8x1xf32>,
    } else {
    }
    return
  }
  func.func @transform_0(%arg0: i32, %arg1: i32) -> (i32, i32) {
    %c0_i32 = arith.constant 0 : i32
    %c0_i32_0 = arith.constant 0 : i32
    %c0_i32_1 = arith.constant 0 : i32
    return %c0_i32, %c0_i32_0 : i32, i32
  }
  func.func @transform_1(%arg0: i32, %arg1: i32) -> (i32, i32) {
    %c2_i32 = arith.constant 2 : i32
    %0 = arith.muli %arg0, %c2_i32 : i32
    %1 = arith.addi %0, %arg1 : i32
    %c0_i32 = arith.constant 0 : i32
    %c0_i32_0 = arith.constant 0 : i32
    return %c0_i32, %1 : i32, i32
  }
  func.func @transform_2(%arg0: i32, %arg1: i32) -> (i32, i32, i32) {
    %c0_i32 = arith.constant 0 : i32
    %c0_i32_0 = arith.constant 0 : i32
    %c0_i32_1 = arith.constant 0 : i32
    return %arg0, %c0_i32, %c0_i32_0 : i32, i32, i32
  }
  func.func @transform_3(%arg0: i32, %arg1: i32) -> (i32, i32, i32) {
    %c0_i32 = arith.constant 0 : i32
    %c0_i32_0 = arith.constant 0 : i32
    %c0_i32_1 = arith.constant 0 : i32
    return %arg0, %c0_i32, %c0_i32_0 : i32, i32, i32
  }
  func.func @transform_4(%arg0: i32, %arg1: i32) -> (i32, i32, i32) {
    %c0_i32 = arith.constant 0 : i32
    %c0_i32_0 = arith.constant 0 : i32
    %c0_i32_1 = arith.constant 0 : i32
    return %arg0, %c0_i32, %c0_i32_0 : i32, i32, i32
  }
}

</mosaic_0001>

<llo_original>
// kernel: tpu_custom_call.1
$region0: #{tpu_custom_call.1}
  #allocation0 [shape = 'u32[]', space=smem, size = 0x4, offset = 0x4, fixed_abs, tag = 'smem constant byte address 0x4 - core index']
  #allocation1 [shape = 'u32[144,128]{1,0:T(1,128)}', space=vmem, size = 0x12000, scoped, tag = 'internal scratch']
  #allocation2 [shape = 'f32[16,32]{1,0:T(8,128)}', space=vmem, size = 0x2000, scoped, tag = 'scratch operand']
  #allocation3 [shape = 'f32[16,1]{1,0:T(8,128)}', space=vmem, size = 0x2000, scoped, tag = 'scratch operand']
  #allocation4 [shape = 'f32[8,1]{1,0:T(8,128)}', space=vmem, size = 0x1000, scoped, tag = 'scratch operand']
  %s0 = inlined_call_operand.hbm [shape: f32[16,32], index: 0, kind: input, shape index: {}]
  %s1 = inlined_call_operand.hbm [shape: f32[32,4096], index: 1, kind: input, shape index: {}]
  %s2 = inlined_call_operand.hbm [shape: f32[2,8,1], index: 2, kind: output, shape index: {0}]
  %s3 = inlined_call_operand.hbm [shape: f32[2,8,1], index: 3, kind: output, shape index: {1}]
  %s4 = inlined_call_operand.hbm [shape: f32[2,8,1], index: 4, kind: output, shape index: {2}]
  %5 = xla_tuple %s2, %s3, %s4
  %s6 = sld [smem:[#allocation0]]
  $region73: #{tpu_custom_call.1} parent=0
    _
  %s8 = ssub.s32 1, %s6
  %s9 = scalar_select 0, %s8, %s6
  $region1: #{tpu_custom_call.1} parent=0
    #allocation5 [shape = 'u8[8192]{0}', space=vmem, size = 0x2000, scoped, tag = 'input window, operand 0, single buffered']
    #allocation6 [shape = 's32[2]{0}', space=sflag, size = 0x8, scoped, tag = 'scoped memory for tpu_custom_call.1']
    #allocation7 [shape = 's32[2]{0}', space=sflag, size = 0x8, scoped, tag = 'scoped memory for tpu_custom_call.1']
    #allocation8 [shape = 'u8[262144]{0}', space=vmem, size = 0x40000, scoped, tag = 'input window, operand 1']
    #allocation9 [shape = 's32[2]{0}', space=sflag, size = 0x8, scoped, tag = 'scoped memory for tpu_custom_call.1']
    #allocation10 [shape = 'u8[8192]{0}', space=vmem, size = 0x2000, scoped, tag = 'output window, operand 0']
    #allocation11 [shape = 'u8[8192]{0}', space=vmem, size = 0x2000, scoped, tag = 'output window, operand 1']
    #allocation12 [shape = 's32[2]{0}', space=sflag, size = 0x8, scoped, tag = 'scoped memory for tpu_custom_call.1']
    #allocation13 [shape = 'u8[8192]{0}', space=vmem, size = 0x2000, scoped, tag = 'output window, operand 2']
    %10 = vsyncpa [#allocation6], 0
    %11 = vsyncpa [#allocation9], 0
    %s12 = scalar_lea.sflag [#allocation9], 1
    %13 = vsyncpa %s12, 0
    %14 = vsyncpa [#allocation7], 0
    %s15 = scalar_lea.sflag [#allocation7], 1
    %16 = vsyncpa %s15, 0
    %17 = vsyncpa [#allocation12], 0
    %s18 = scalar_lea.sflag [#allocation12], 1
    %19 = vsyncpa %s18, 0
    loop: start=0, step=1, limit=6
    $region2: #{tpu_custom_call.1} parent=1 // loop_pre_header
      _
    $region3: #{tpu_custom_call.1} parent=1 // loop_header
      %s21 = sphi 0, %s25
      %p22 = scmp.ge.s32.totalorder %s21, 6
      %s28 = sphi 0, %s40
      %s29 = sphi 0, %s36
      %s30 = sphi 0, %s28
      %s31 = sphi 0, %s29
      %s32 = sphi 0, %s30
      %s33 = sphi 0, %s31
      %s41 = sphi 0, %s41
      %s43 = sphi 0, %s41
      %s44 = sphi 0, %s43
      %s58 = sphi 0, %s44
      %s68 = sphi 0, %s70
      %s71 = sphi 0, %s68
      %s72 = sphi 0, %s71
      %s88 = sphi 0, %s72
      %s94 = sphi 0, %s96
      %s97 = sphi 0, %s94
      %s98 = sphi 0, %s97
      %s114 = sphi 0, %s98
      %s120 = sphi 0, %s122
      %s123 = sphi 0, %s120
      %s124 = sphi 0, %s123
      %s140 = sphi 0, %s124
      %s146 = sphi 0, %s148
      %s149 = sphi 0, %s146
      %s150 = sphi 0, %s149
      %s166 = sphi 0, %s150
    $region4: #{tpu_custom_call.1} parent=1 // loop_header_branch
      %24 = sbr.rel (%p22) target = $region8
    $region5: #{tpu_custom_call.1} parent=1 // loop_body
      %s26 = ssub.s32 %s21, 1
      %s27 = ssub.s32 %s21, 2
      %s34 = sadd.s32 1, %s29
      %p35 = scmp.ge.s32.totalorder %s34, 2
      %s36 = scalar_select %p35, 0, %s34
      %s37 = sadd.s32 1, %s28
      %s38 = scalar_select %p35, %s37, %s28
      %p39 = scmp.ge.s32.totalorder %s38, 2
      %s40 = scalar_select %p39, 0, %s38
      %s42 = sadd.s32 %s41, 1
      %p45 = scmp.eq.s32.totalorder %s21, 3
      %p46 = scmp.ne.s32.totalorder %s41, %s43
      %p47 = scmp.eq.s32.totalorder %s21, 0
      %p48 = por %p46, %p47
      %p49 = scmp.ne.s32.totalorder %s41, %s43
      %p50 = scmp.eq.s32.totalorder %s26, 3
      %p51 = por %p49, %p50
      %p52 = scmp.ne.s32.totalorder %s43, %s44
      %p53 = scmp.eq.s32.totalorder %s26, 0
      %p54 = por %p52, %p53
      %p55 = scmp.ne.s32.totalorder %s43, %s44
      %p56 = scmp.eq.s32.totalorder %s27, 3
      %p57 = por %p55, %p56
      %p59 = scmp.ne.s32.totalorder %s44, %s58
      %p60 = scmp.eq.s32.totalorder %s27, 0
      %p61 = por %p59, %p60
      %s62 = smul.u32 %s28, 2
      %s63 = sadd.s32 %s62, %s29
      %s64 = smul.u32 %s40, 2
      %s65 = sadd.s32 %s64, %s36
      %s66 = ssub.s32 %s63, %s65
      %p67 = scmp.eq.s32.totalorder %s66, 0
      %s69 = sadd.s32 %s68, 1
      %s70 = scalar_select %p67, %s68, %s69
      %p73 = pneg %p67
      %p74 = scmp.eq.s32.totalorder %s21, 3
      %p75 = por %p73, %p74
      %p76 = scmp.ne.s32.totalorder %s68, %s71
      %p77 = scmp.eq.s32.totalorder %s21, 0
      %p78 = por %p76, %p77
      %p79 = scmp.ne.s32.totalorder %s68, %s71
      %p80 = scmp.eq.s32.totalorder %s26, 3
      %p81 = por %p79, %p80
      %p82 = scmp.ne.s32.totalorder %s71, %s72
      %p83 = scmp.eq.s32.totalorder %s26, 0
      %p84 = por %p82, %p83
      %p85 = scmp.ne.s32.totalorder %s71, %s72
      %p86 = scmp.eq.s32.totalorder %s27, 3
      %p87 = por %p85, %p86
      %p89 = scmp.ne.s32.totalorder %s72, %s88
      %p90 = scmp.eq.s32.totalorder %s27, 0
      %p91 = por %p89, %p90
      %s92 = ssub.s32 %s28, %s40
      %p93 = scmp.eq.s32.totalorder %s92, 0
      %s95 = sadd.s32 %s94, 1
      %s96 = scalar_select %p93, %s94, %s95
      %p99 = pneg %p93
      %p100 = scmp.eq.s32.totalorder %s21, 3
      %p101 = por %p99, %p100
      %p102 = scmp.ne.s32.totalorder %s94, %s97
      %p103 = scmp.eq.s32.totalorder %s21, 0
      %p104 = por %p102, %p103
      %p105 = scmp.ne.s32.totalorder %s94, %s97
      %p106 = scmp.eq.s32.totalorder %s26, 3
      %p107 = por %p105, %p106
      %p108 = scmp.ne.s32.totalorder %s97, %s98
      %p109 = scmp.eq.s32.totalorder %s26, 0
      %p110 = por %p108, %p109
      %p111 = scmp.ne.s32.totalorder %s97, %s98
      %p112 = scmp.eq.s32.totalorder %s27, 3
      %p113 = por %p111, %p112
      %p115 = scmp.ne.s32.totalorder %s98, %s114
      %p116 = scmp.eq.s32.totalorder %s27, 0
      %p117 = por %p115, %p116
      %s118 = ssub.s32 %s28, %s40
      %p119 = scmp.eq.s32.totalorder %s118, 0
      %s121 = sadd.s32 %s120, 1
      %s122 = scalar_select %p119, %s120, %s121
      %p125 = pneg %p119
      %p126 = scmp.eq.s32.totalorder %s21, 3
      %p127 = por %p125, %p126
      %p128 = scmp.ne.s32.totalorder %s120, %s123
      %p129 = scmp.eq.s32.totalorder %s21, 0
      %p130 = por %p128, %p129
      %p131 = scmp.ne.s32.totalorder %s120, %s123
      %p132 = scmp.eq.s32.totalorder %s26, 3
      %p133 = por %p131, %p132
      %p134 = scmp.ne.s32.totalorder %s123, %s124
      %p135 = scmp.eq.s32.totalorder %s26, 0
      %p136 = por %p134, %p135
      %p137 = scmp.ne.s32.totalorder %s123, %s124
      %p138 = scmp.eq.s32.totalorder %s27, 3
      %p139 = por %p137, %p138
      %p141 = scmp.ne.s32.totalorder %s124, %s140
      %p142 = scmp.eq.s32.totalorder %s27, 0
      %p143 = por %p141, %p142
      %s144 = ssub.s32 %s28, %s40
      %p145 = scmp.eq.s32.totalorder %s144, 0
      %s147 = sadd.s32 %s146, 1
      %s148 = scalar_select %p145, %s146, %s147
      %p151 = pneg %p145
      %p152 = scmp.eq.s32.totalorder %s21, 3
      %p153 = por %p151, %p152
      %p154 = scmp.ne.s32.totalorder %s146, %s149
      %p155 = scmp.eq.s32.totalorder %s21, 0
      %p156 = por %p154, %p155
      %p157 = scmp.ne.s32.totalorder %s146, %s149
      %p158 = scmp.eq.s32.totalorder %s26, 3
      %p159 = por %p157, %p158
      %p160 = scmp.ne.s32.totalorder %s149, %s150
      %p161 = scmp.eq.s32.totalorder %s26, 0
      %p162 = por %p160, %p161
      %p163 = scmp.ne.s32.totalorder %s149, %s150
      %p164 = scmp.eq.s32.totalorder %s27, 3
      %p165 = por %p163, %p164
      %p167 = scmp.ne.s32.totalorder %s150, %s166
      %p168 = scmp.eq.s32.totalorder %s27, 0
      %p169 = por %p167, %p168
      %p170 = scmp.le.s32.totalorder 1, %s21
      %p171 = scmp.lt.s32.totalorder %s21, 5
      %p172 = pnand %p170, %p171
      %p173 = pneg %p172
      // Predicated region
      $region9: #{tpu_custom_call.1} parent=5 // pred_check
        _
      $region10: #{tpu_custom_call.1} parent=5 // pred_check_branch
        %175 = sbr.rel (%p172) target = $region12
      $region11: #{tpu_custom_call.1} parent=5 // pred_region
        %s176 = ssub.s32 %s21, 1
        // Predicated region
        $region13: #{tpu_custom_call.1} parent=11 // pred_check
          %p177 = pneg %p54
        $region14: #{tpu_custom_call.1} parent=11 // pred_check_branch
          %179 = sbr.rel (%p177) target = $region16
        $region15: #{tpu_custom_call.1} parent=11 // pred_region
          %s181 = ssub.s32 256, 256
          %182 = vsyncadd [#allocation6], %s181
          %s183 = sshll.u32 [#allocation5], 4
          %s184 = int_to_ptr.vmem [resolvable:$true] %s183
          %189 = dma.hbm_to_vmem [thread:$0]  %s0, 256, %s184, [#allocation6], 128, 128, 8
        $region16: #{tpu_custom_call.1} parent=11 // pred_fallthru
          _
      $region12: #{tpu_custom_call.1} parent=5 // pred_fallthru
        _
      %p190 = scmp.lt.s32.totalorder %s21, 4
      // Predicated region
      $region17: #{tpu_custom_call.1} parent=5 // pred_check
        %p191 = pneg %p190
      $region18: #{tpu_custom_call.1} parent=5 // pred_check_branch
        %193 = sbr.rel (%p191) target = $region20
      $region19: #{tpu_custom_call.1} parent=5 // pred_region
        // Predicated region
        $region21: #{tpu_custom_call.1} parent=19 // pred_check
          %p194 = pneg %p78
        $region22: #{tpu_custom_call.1} parent=19 // pred_check_branch
          %196 = sbr.rel (%p194) target = $region24
        $region23: #{tpu_custom_call.1} parent=19 // pred_region
          %s197 = sand.u32 %s68, 1
          %s198 = scalar_lea.sflag [#allocation9], %s197
          %s199 = sand.u32 %s68, 1
          %s200 = smul.addr %s199, 256
          %s201 = scalar_lea.vmem [#allocation8], %s200
          %s202 = smul.u32 %s28, 2
          %s203 = sadd.s32 %s202, %s29
          %s204 = smul.u32 8, %s203
          %s206 = ssub.s32 4096, 4096
          %207 = vsyncadd %s198, %s206
          %s208 = smul.addr %s204, 128
          %s209 = scalar_lea.hbm %s1, %s208
          %s210 = sshll.u32 %s201, 4
          %s211 = int_to_ptr.vmem [resolvable:$true] %s210
          %216 = dma.hbm_to_vmem [thread:$0]  %s209, 4096, %s211, %s198, 4096, 1024, 64
        $region24: #{tpu_custom_call.1} parent=19 // pred_fallthru
          _
      $region20: #{tpu_custom_call.1} parent=5 // pred_fallthru
        _
      %p217 = scmp.le.s32.totalorder 1, %s21
      %p218 = scmp.lt.s32.totalorder %s21, 5
      %p219 = pnand %p217, %p218
      %p220 = pneg %p219
      // Predicated region
      $region25: #{tpu_custom_call.1} parent=5 // pred_check
        _
      $region26: #{tpu_custom_call.1} parent=5 // pred_check_branch
        %222 = sbr.rel (%p219) target = $region28
      $region27: #{tpu_custom_call.1} parent=5 // pred_region
        %s223 = ssub.s32 %s21, 1
        // Predicated region
        $region29: #{tpu_custom_call.1} parent=27 // pred_check
          %p224 = pneg %p54
        $region30: #{tpu_custom_call.1} parent=27 // pred_check_branch
          %226 = sbr.rel (%p224) target = $region32
        $region31: #{tpu_custom_call.1} parent=27 // pred_region
          %227 = dma.done [#allocation6], 256
        $region32: #{tpu_custom_call.1} parent=27 // pred_fallthru
          _
        %s228 = sand.u32 %s71, 1
        %s229 = scalar_lea.sflag [#allocation9], %s228
        %s230 = sand.u32 %s71, 1
        %s231 = smul.addr %s230, 256
        %s232 = scalar_lea.vmem [#allocation8], %s231
        // Predicated region
        $region33: #{tpu_custom_call.1} parent=27 // pred_check
          %p233 = pneg %p84
        $region34: #{tpu_custom_call.1} parent=27 // pred_check_branch
          %235 = sbr.rel (%p233) target = $region36
        $region35: #{tpu_custom_call.1} parent=27 // pred_region
          %236 = dma.done %s229, 4096
        $region36: #{tpu_custom_call.1} parent=27 // pred_fallthru
          _
        %p237 = pneg %p54
        %p238 = pneg %p51
        %s239 = sand.u32 %s71, 1
        %s240 = scalar_lea.sflag [#allocation9], %s239
        %s241 = sand.u32 %s71, 1
        %s242 = smul.addr %s241, 256
        %s243 = scalar_lea.vmem [#allocation8], %s242
        %p244 = pneg %p84
        %p245 = pneg %p81
        %p246 = pneg %p110
        %p247 = pneg %p107
        %s248 = sand.u32 %s97, 1
        %s249 = scalar_lea.sflag [#allocation7], %s248
        %s250 = sand.u32 %s97, 1
        %s251 = smul.addr %s250, 8
        %s252 = scalar_lea.vmem [#allocation10], %s251
        %p253 = pneg %p136
        %p254 = pneg %p133
        %s255 = sand.u32 %s26, 1
        %s256 = scalar_lea.sflag [#allocation12], %s255
        %s257 = sand.u32 %s123, 1
        %s258 = smul.addr %s257, 8
        %s259 = scalar_lea.vmem [#allocation11], %s258
        %p260 = pneg %p162
        %p261 = pneg %p159
        %s262 = sand.u32 %s26, 1
        %s263 = scalar_lea.sflag [#allocation12], %s262
        %s264 = sand.u32 %s149, 1
        %s265 = smul.addr %s264, 8
        %s266 = scalar_lea.vmem [#allocation13], %s265
        %s267 = smul.u32 %s30, 2
        %s268 = sadd.s32 %s267, %s31
        %s269 = smul.u32 8, %s268
        %p270 = scmp.eq.s32.totalorder %s31, 0
        // Predicated region
        $region37: #{tpu_custom_call.1} parent=27 // pred_check
          %p271 = pneg %p270
        $region38: #{tpu_custom_call.1} parent=27 // pred_check_branch
          %273 = sbr.rel (%p271) target = $region40
        $region39: #{tpu_custom_call.1} parent=27 // pred_region
          %v274 = vld [vmem:[#allocation5] sm:$0xff]
          %v275 = vld [vmem:[#allocation5 + $0x8] sm:$0xff]
          %v276 = vmul.f32 %v274, %v274
          %v277 = vmul.f32 %v275, %v275
          %vm278 = vcmask 261120
          %v279 = vsel %vm278, %v276, 0.0
          %280 = vadd.xlane.f32.xlu0 %v279
          %v281 = vpop.xlane.xlu0 %280
          %v282 = vsel %vm278, %v277, 0.0
          %283 = vadd.xlane.f32.xlu0 %v282
          %v284 = vpop.xlane.xlu0 %283
          %v285 = vrsqrt.pop %v281
          %v286 = vmul.f32 %v281, %v285
          %vm287 = vcmp.eq.f32.partialorder %v281, inf
          %v288 = vsel %vm287, %v281, %v286
          %vm289 = vcmp.eq.f32.partialorder %v281, 0.0
          %v290 = vand.u32 %v281, 2147483648
          %v291 = vsel %vm289, %v290, %v288
          %v292 = vrsqrt.pop %v284
          %v293 = vmul.f32 %v284, %v292
          %vm294 = vcmp.eq.f32.partialorder %v284, inf
          %v295 = vsel %vm294, %v284, %v293
          %vm296 = vcmp.eq.f32.partialorder %v284, 0.0
          %v297 = vand.u32 %v284, 2147483648
          %v298 = vsel %vm296, %v297, %v295
          %v299 = vrcp.pop %v291
          %v300 = vmul.f32 %v274, %v299
          %v301 = vrcp.pop %v298
          %v302 = vmul.f32 %v275, %v301
          %v303 = vmul.f32 %v300, 25.0
          %v304 = vmul.f32 %v302, 25.0
          %305 = vst.msk [vmem:[#allocation2] sm:$0xff] %vm278, %v303
          %306 = vst.msk [vmem:[#allocation2 + $0x8] sm:$0xff] %vm278, %v304
          %vm307 = vcmask 7168
          %308 = vst.msk [vmem:[#allocation3] sm:$0xff] %vm307, 0.0
          %309 = vst.msk [vmem:[#allocation3 + $0x8] sm:$0xff] %vm307, 0.0
          %310 = vst.msk [vmem:[#allocation4] sm:$0xff] %vm307, 0.0
        $region40: #{tpu_custom_call.1} parent=27 // pred_fallthru
          _
        %v311 = vld [vmem:[#allocation2] sm:$0xff]
        %v312 = vld [vmem:[#allocation2 + $0x8] sm:$0xff]
        %v313 = vld [vmem:[%s232] sm:$0xff]
        %v314 = vld [vmem:[%s232 + $0x8] sm:$0xff]
        %v315 = vld [vmem:[%s232 + $0x10] sm:$0xff]
        %v316 = vld [vmem:[%s232 + $0x18] sm:$0xff]
        %v317 = vld [vmem:[%s232 + $0x20] sm:$0xff]
        %v318 = vld [vmem:[%s232 + $0x28] sm:$0xff]
        %v319 = vld [vmem:[%s232 + $0x30] sm:$0xff]
        %v320 = vld [vmem:[%s232 + $0x38] sm:$0xff]
        %v321 = vld [vmem:[%s232 + $0x40] sm:$0xff]
        %v322 = vld [vmem:[%s232 + $0x48] sm:$0xff]
        %v323 = vld [vmem:[%s232 + $0x50] sm:$0xff]
        %v324 = vld [vmem:[%s232 + $0x58] sm:$0xff]
        %v325 = vld [vmem:[%s232 + $0x60] sm:$0xff]
        %v326 = vld [vmem:[%s232 + $0x68] sm:$0xff]
        %v327 = vld [vmem:[%s232 + $0x70] sm:$0xff]
        %v328 = vld [vmem:[%s232 + $0x78] sm:$0xff]
        %v329 = vld [vmem:[%s232 + $0x80] sm:$0xff]
        %v330 = vld [vmem:[%s232 + $0x88] sm:$0xff]
        %v331 = vld [vmem:[%s232 + $0x90] sm:$0xff]
        %v332 = vld [vmem:[%s232 + $0x98] sm:$0xff]
        %v333 = vld [vmem:[%s232 + $0xa0] sm:$0xff]
        %v334 = vld [vmem:[%s232 + $0xa8] sm:$0xff]
        %v335 = vld [vmem:[%s232 + $0xb0] sm:$0xff]
        %v336 = vld [vmem:[%s232 + $0xb8] sm:$0xff]
        %v337 = vld [vmem:[%s232 + $0xc0] sm:$0xff]
        %v338 = vld [vmem:[%s232 + $0xc8] sm:$0xff]
        %v339 = vld [vmem:[%s232 + $0xd0] sm:$0xff]
        %v340 = vld [vmem:[%s232 + $0xd8] sm:$0xff]
        %v341 = vld [vmem:[%s232 + $0xe0] sm:$0xff]
        %v342 = vld [vmem:[%s232 + $0xe8] sm:$0xff]
        %v343 = vld [vmem:[%s232 + $0xf0] sm:$0xff]
        %v344 = vld [vmem:[%s232 + $0xf8] sm:$0xff]
        %vm345 = vcmask 261120
        %v347 = vsel %vm345, %v311, 0
        %v350 = vsel %vm345, %v312, 0
        %352 = vmatprep.subr.mxu0 %v314
        %353 = vmatpush1.msra.mxu0 %v313
        %354 = vmatprep.subr.mxu0 %v322
        %355 = vmatpush1.msra.mxu0 %v321
        %356 = vmatprep.subr.mxu0 %v330
        %357 = vmatpush1.msra.mxu0 %v329
        %358 = vmatprep.subr.mxu0 %v338
        %359 = vmatpush1.msra.mxu0 %v337
        %360 = vmatprep.subr.mxu0 0.0
        %361 = vmatpush1.msra.mxu0 0.0
        %362 = vmatprep.subr.mxu0 0.0
        %363 = vmatpush1.msra.mxu0 0.0
        %364 = vmatprep.subr.mxu0 0.0
        %365 = vmatpush1.msra.mxu0 0.0
        %366 = vmatprep.subr.mxu0 0.0
        %367 = vmatpush1.msra.mxu0 0.0
        %368 = vmatprep.subr.mxu0 0.0
        %369 = vmatpush1.msra.mxu0 0.0
        %370 = vmatprep.subr.mxu0 0.0
        %371 = vmatpush1.msra.mxu0 0.0
        %372 = vmatprep.subr.mxu0 0.0
        %373 = vmatpush1.msra.mxu0 0.0
        %374 = vmatprep.subr.mxu0 0.0
        %375 = vmatpush1.msra.mxu0 0.0
        %376 = vmatprep.subr.mxu0 0.0
        %377 = vmatpush1.msra.mxu0 0.0
        %378 = vmatprep.subr.mxu0 0.0
        %379 = vmatpush1.msra.mxu0 0.0
        %380 = vmatprep.subr.mxu0 0.0
        %381 = vmatpush1.msra.mxu0 0.0
        %382 = vmatprep.subr.mxu0 0.0
        %383 = vmatpush1.msra.mxu0 0.0
        %384 = vmatprep.subr.mxu0 0.0
        %385 = vmatpush1.msra.mxu0 0.0
        %386 = vmatprep.subr.mxu0 0.0
        %387 = vmatpush1.msra.mxu0 0.0
        %388 = vmatprep.subr.mxu0 0.0
        %389 = vmatpush1.msra.mxu0 0.0
        %390 = vmatprep.subr.mxu0 0.0
        %391 = vmatpush1.msra.mxu0 0.0
        %392 = vmatprep.subr.mxu0 0.0
        %393 = vmatpush1.msra.mxu0 0.0
        %394 = vmatprep.subr.mxu0 0.0
        %395 = vmatpush1.msra.mxu0 0.0
        %396 = vmatprep.subr.mxu0 0.0
        %397 = vmatpush1.msra.mxu0 0.0
        %398 = vmatprep.subr.mxu0 0.0
        %399 = vmatpush1.msra.mxu0 0.0
        %400 = vmatprep.subr.mxu0 0.0
        %401 = vmatpush1.msra.mxu0 0.0
        %402 = vmatprep.subr.mxu0 0.0
        %403 = vmatpush1.msra.mxu0 0.0
        %404 = vmatprep.subr.mxu0 0.0
        %405 = vmatpush1.msra.mxu0 0.0
        %406 = vmatprep.subr.mxu0 0.0
        %407 = vmatpush1.msra.mxu0 0.0
        %408 = vmatprep.subr.mxu0 0.0
        %409 = vmatpush1.msra.mxu0 0.0
        %410 = vmatprep.subr.mxu0 0.0
        %411 = vmatpush1.msra.mxu0 0.0
        %412 = vmatprep.subr.mxu0 0.0
        %413 = vmatpush1.msra.mxu0 0.0
        %414 = vmatprep.subr.mxu0 0.0
        %415 = vmatpush1.msra.mxu0 0.0
        %416 = vmatprep.mubr.f32.mxu0 0.0
        %417 = vmatmul.mubr.f32.gmra.mrb[0].mxu0 %v347
        %v418 = vpop.f32.mrb[0].mxu0
        %v419 = vadd.f32 0.0, %v418
        %v420 = vpop.f32.mrb[0].mxu0
        %v421 = vadd.f32 0.0, %v420
        %422 = vmatprep.mubr.f32.mxu0 0.0
        %423 = vmatmul.mubr.f32.gmra.mrb[0].mxu0 %v350
        %v424 = vpop.f32.mrb[0].mxu0
        %v425 = vadd.f32 0.0, %v424
        %v426 = vpop.f32.mrb[0].mxu0
        %v427 = vadd.f32 0.0, %v426
        %428 = vdwg.mxu0
        %429 = vmatprep.subr.mxu0 %v316
        %430 = vmatpush1.msra.mxu0 %v315
        %431 = vmatprep.subr.mxu0 %v324
        %432 = vmatpush1.msra.mxu0 %v323
        %433 = vmatprep.subr.mxu0 %v332
        %434 = vmatpush1.msra.mxu0 %v331
        %435 = vmatprep.subr.mxu0 %v340
        %436 = vmatpush1.msra.mxu0 %v339
        %437 = vmatprep.subr.mxu0 0.0
        %438 = vmatpush1.msra.mxu0 0.0
        %439 = vmatprep.subr.mxu0 0.0
        %440 = vmatpush1.msra.mxu0 0.0
        %441 = vmatprep.subr.mxu0 0.0
        %442 = vmatpush1.msra.mxu0 0.0
        %443 = vmatprep.subr.mxu0 0.0
        %444 = vmatpush1.msra.mxu0 0.0
        %445 = vmatprep.subr.mxu0 0.0
        %446 = vmatpush1.msra.mxu0 0.0
        %447 = vmatprep.subr.mxu0 0.0
        %448 = vmatpush1.msra.mxu0 0.0
        %449 = vmatprep.subr.mxu0 0.0
        %450 = vmatpush1.msra.mxu0 0.0
        %451 = vmatprep.subr.mxu0 0.0
        %452 = vmatpush1.msra.mxu0 0.0
        %453 = vmatprep.subr.mxu0 0.0
        %454 = vmatpush1.msra.mxu0 0.0
        %455 = vmatprep.subr.mxu0 0.0
        %456 = vmatpush1.msra.mxu0 0.0
        %457 = vmatprep.subr.mxu0 0.0
        %458 = vmatpush1.msra.mxu0 0.0
        %459 = vmatprep.subr.mxu0 0.0
        %460 = vmatpush1.msra.mxu0 0.0
        %461 = vmatprep.subr.mxu0 0.0
        %462 = vmatpush1.msra.mxu0 0.0
        %463 = vmatprep.subr.mxu0 0.0
        %464 = vmatpush1.msra.mxu0 0.0
        %465 = vmatprep.subr.mxu0 0.0
        %466 = vmatpush1.msra.mxu0 0.0
        %467 = vmatprep.subr.mxu0 0.0
        %468 = vmatpush1.msra.mxu0 0.0
        %469 = vmatprep.subr.mxu0 0.0
        %470 = vmatpush1.msra.mxu0 0.0
        %471 = vmatprep.subr.mxu0 0.0
        %472 = vmatpush1.msra.mxu0 0.0
        %473 = vmatprep.subr.mxu0 0.0
        %474 = vmatpush1.msra.mxu0 0.0
        %475 = vmatprep.subr.mxu0 0.0
        %476 = vmatpush1.msra.mxu0 0.0
        %477 = vmatprep.subr.mxu0 0.0
        %478 = vmatpush1.msra.mxu0 0.0
        %479 = vmatprep.subr.mxu0 0.0
        %480 = vmatpush1.msra.mxu0 0.0
        %481 = vmatprep.subr.mxu0 0.0
        %482 = vmatpush1.msra.mxu0 0.0
        %483 = vmatprep.subr.mxu0 0.0
        %484 = vmatpush1.msra.mxu0 0.0
        %485 = vmatprep.subr.mxu0 0.0
        %486 = vmatpush1.msra.mxu0 0.0
        %487 = vmatprep.subr.mxu0 0.0
        %488 = vmatpush1.msra.mxu0 0.0
        %489 = vmatprep.subr.mxu0 0.0
        %490 = vmatpush1.msra.mxu0 0.0
        %491 = vmatprep.subr.mxu0 0.0
        %492 = vmatpush1.msra.mxu0 0.0
        %493 = vmatprep.mubr.f32.mxu0 0.0
        %494 = vmatmul.mubr.f32.gmra.mrb[0].mxu0 %v347
        %v495 = vpop.f32.mrb[0].mxu0
        %v496 = vadd.f32 0.0, %v495
        %v497 = vpop.f32.mrb[0].mxu0
        %v498 = vadd.f32 0.0, %v497
        %499 = vmatprep.mubr.f32.mxu0 0.0
        %500 = vmatmul.mubr.f32.gmra.mrb[0].mxu0 %v350
        %v501 = vpop.f32.mrb[0].mxu0
        %v502 = vadd.f32 0.0, %v501
        %v503 = vpop.f32.mrb[0].mxu0
        %v504 = vadd.f32 0.0, %v503
        %505 = vdwg.mxu0
        %506 = vmatprep.subr.mxu0 %v318
        %507 = vmatpush1.msra.mxu0 %v317
        %508 = vmatprep.subr.mxu0 %v326
        %509 = vmatpush1.msra.mxu0 %v325
        %510 = vmatprep.subr.mxu0 %v334
        %511 = vmatpush1.msra.mxu0 %v333
        %512 = vmatprep.subr.mxu0 %v342
        %513 = vmatpush1.msra.mxu0 %v341
        %514 = vmatprep.subr.mxu0 0.0
        %515 = vmatpush1.msra.mxu0 0.0
        %516 = vmatprep.subr.mxu0 0.0
        %517 = vmatpush1.msra.mxu0 0.0
        %518 = vmatprep.subr.mxu0 0.0
        %519 = vmatpush1.msra.mxu0 0.0
        %520 = vmatprep.subr.mxu0 0.0
        %521 = vmatpush1.msra.mxu0 0.0
        %522 = vmatprep.subr.mxu0 0.0
        %523 = vmatpush1.msra.mxu0 0.0
        %524 = vmatprep.subr.mxu0 0.0
        %525 = vmatpush1.msra.mxu0 0.0
        %526 = vmatprep.subr.mxu0 0.0
        %527 = vmatpush1.msra.mxu0 0.0
        %528 = vmatprep.subr.mxu0 0.0
        %529 = vmatpush1.msra.mxu0 0.0
        %530 = vmatprep.subr.mxu0 0.0
        %531 = vmatpush1.msra.mxu0 0.0
        %532 = vmatprep.subr.mxu0 0.0
        %533 = vmatpush1.msra.mxu0 0.0
        %534 = vmatprep.subr.mxu0 0.0
        %535 = vmatpush1.msra.mxu0 0.0
        %536 = vmatprep.subr.mxu0 0.0
        %537 = vmatpush1.msra.mxu0 0.0
        %538 = vmatprep.subr.mxu0 0.0
        %539 = vmatpush1.msra.mxu0 0.0
        %540 = vmatprep.subr.mxu0 0.0
        %541 = vmatpush1.msra.mxu0 0.0
        %542 = vmatprep.subr.mxu0 0.0
        %543 = vmatpush1.msra.mxu0 0.0
        %544 = vmatprep.subr.mxu0 0.0
        %545 = vmatpush1.msra.mxu0 0.0
        %546 = vmatprep.subr.mxu0 0.0
        %547 = vmatpush1.msra.mxu0 0.0
        %548 = vmatprep.subr.mxu0 0.0
        %549 = vmatpush1.msra.mxu0 0.0
        %550 = vmatprep.subr.mxu0 0.0
        %551 = vmatpush1.msra.mxu0 0.0
        %552 = vmatprep.subr.mxu0 0.0
        %553 = vmatpush1.msra.mxu0 0.0
        %554 = vmatprep.subr.mxu0 0.0
        %555 = vmatpush1.msra.mxu0 0.0
        %556 = vmatprep.subr.mxu0 0.0
        %557 = vmatpush1.msra.mxu0 0.0
        %558 = vmatprep.subr.mxu0 0.0
        %559 = vmatpush1.msra.mxu0 0.0
        %560 = vmatprep.subr.mxu0 0.0
        %561 = vmatpush1.msra.mxu0 0.0
        %562 = vmatprep.subr.mxu0 0.0
        %563 = vmatpush1.msra.mxu0 0.0
        %564 = vmatprep.subr.mxu0 0.0
        %565 = vmatpush1.msra.mxu0 0.0
        %566 = vmatprep.subr.mxu0 0.0
        %567 = vmatpush1.msra.mxu0 0.0
        %568 = vmatprep.subr.mxu0 0.0
        %569 = vmatpush1.msra.mxu0 0.0
        %570 = vmatprep.mubr.f32.mxu0 0.0
        %571 = vmatmul.mubr.f32.gmra.mrb[0].mxu0 %v347
        %v572 = vpop.f32.mrb[0].mxu0
        %v573 = vadd.f32 0.0, %v572
        %v574 = vpop.f32.mrb[0].mxu0
        %v575 = vadd.f32 0.0, %v574
        %576 = vmatprep.mubr.f32.mxu0 0.0
        %577 = vmatmul.mubr.f32.gmra.mrb[0].mxu0 %v350
        %v578 = vpop.f32.mrb[0].mxu0
        %v579 = vadd.f32 0.0, %v578
        %v580 = vpop.f32.mrb[0].mxu0
        %v581 = vadd.f32 0.0, %v580
        %582 = vdwg.mxu0
        %583 = vmatprep.subr.mxu0 %v320
        %584 = vmatpush1.msra.mxu0 %v319
        %585 = vmatprep.subr.mxu0 %v328
        %586 = vmatpush1.msra.mxu0 %v327
        %587 = vmatprep.subr.mxu0 %v336
        %588 = vmatpush1.msra.mxu0 %v335
        %589 = vmatprep.subr.mxu0 %v344
        %590 = vmatpush1.msra.mxu0 %v343
        %591 = vmatprep.subr.mxu0 0.0
        %592 = vmatpush1.msra.mxu0 0.0
        %593 = vmatprep.subr.mxu0 0.0
        %594 = vmatpush1.msra.mxu0 0.0
        %595 = vmatprep.subr.mxu0 0.0
        %596 = vmatpush1.msra.mxu0 0.0
        %597 = vmatprep.subr.mxu0 0.0
        %598 = vmatpush1.msra.mxu0 0.0
        %599 = vmatprep.subr.mxu0 0.0
        %600 = vmatpush1.msra.mxu0 0.0
        %601 = vmatprep.subr.mxu0 0.0
        %602 = vmatpush1.msra.mxu0 0.0
        %603 = vmatprep.subr.mxu0 0.0
        %604 = vmatpush1.msra.mxu0 0.0
        %605 = vmatprep.subr.mxu0 0.0
        %606 = vmatpush1.msra.mxu0 0.0
        %607 = vmatprep.subr.mxu0 0.0
        %608 = vmatpush1.msra.mxu0 0.0
        %609 = vmatprep.subr.mxu0 0.0
        %610 = vmatpush1.msra.mxu0 0.0
        %611 = vmatprep.subr.mxu0 0.0
        %612 = vmatpush1.msra.mxu0 0.0
        %613 = vmatprep.subr.mxu0 0.0
        %614 = vmatpush1.msra.mxu0 0.0
        %615 = vmatprep.subr.mxu0 0.0
        %616 = vmatpush1.msra.mxu0 0.0
        %617 = vmatprep.subr.mxu0 0.0
        %618 = vmatpush1.msra.mxu0 0.0
        %619 = vmatprep.subr.mxu0 0.0
        %620 = vmatpush1.msra.mxu0 0.0
        %621 = vmatprep.subr.mxu0 0.0
        %622 = vmatpush1.msra.mxu0 0.0
        %623 = vmatprep.subr.mxu0 0.0
        %624 = vmatpush1.msra.mxu0 0.0
        %625 = vmatprep.subr.mxu0 0.0
        %626 = vmatpush1.msra.mxu0 0.0
        %627 = vmatprep.subr.mxu0 0.0
        %628 = vmatpush1.msra.mxu0 0.0
        %629 = vmatprep.subr.mxu0 0.0
        %630 = vmatpush1.msra.mxu0 0.0
        %631 = vmatprep.subr.mxu0 0.0
        %632 = vmatpush1.msra.mxu0 0.0
        %633 = vmatprep.subr.mxu0 0.0
        %634 = vmatpush1.msra.mxu0 0.0
        %635 = vmatprep.subr.mxu0 0.0
        %636 = vmatpush1.msra.mxu0 0.0
        %637 = vmatprep.subr.mxu0 0.0
        %638 = vmatpush1.msra.mxu0 0.0
        %639 = vmatprep.subr.mxu0 0.0
        %640 = vmatpush1.msra.mxu0 0.0
        %641 = vmatprep.subr.mxu0 0.0
        %642 = vmatpush1.msra.mxu0 0.0
        %643 = vmatprep.subr.mxu0 0.0
        %644 = vmatpush1.msra.mxu0 0.0
        %645 = vmatprep.subr.mxu0 0.0
        %646 = vmatpush1.msra.mxu0 0.0
        %647 = vmatprep.mubr.f32.mxu0 0.0
        %648 = vmatmul.mubr.f32.gmra.mrb[0].mxu0 %v347
        %v649 = vpop.f32.mrb[0].mxu0
        %v650 = vadd.f32 0.0, %v649
        %v651 = vpop.f32.mrb[0].mxu0
        %v652 = vadd.f32 0.0, %v651
        %653 = vmatprep.mubr.f32.mxu0 0.0
        %654 = vmatmul.mubr.f32.gmra.mrb[0].mxu0 %v350
        %v655 = vpop.f32.mrb[0].mxu0
        %v656 = vadd.f32 0.0, %v655
        %v657 = vpop.f32.mrb[0].mxu0
        %v658 = vadd.f32 0.0, %v657
        %659 = vdwg.mxu0
        %v660 = vsub.f32 %v419, 25.0
        %v661 = vsub.f32 %v421, 25.0
        %v662 = vsub.f32 %v496, 25.0
        %v663 = vsub.f32 %v498, 25.0
        %v664 = vsub.f32 %v573, 25.0
        %v665 = vsub.f32 %v575, 25.0
        %v666 = vsub.f32 %v650, 25.0
        %v667 = vsub.f32 %v652, 25.0
        %v668 = vsub.f32 %v425, 25.0
        %v669 = vsub.f32 %v427, 25.0
        %v670 = vsub.f32 %v502, 25.0
        %v671 = vsub.f32 %v504, 25.0
        %v672 = vsub.f32 %v579, 25.0
        %v673 = vsub.f32 %v581, 25.0
        %v674 = vsub.f32 %v656, 25.0
        %v675 = vsub.f32 %v658, 25.0
        %v676 = vmul.f32 %v660, 1.442695
        %v677 = vpow.pop %v676
        %v678 = vmul.f32 %v661, 1.442695
        %v679 = vpow.pop %v678
        %v680 = vmul.f32 %v662, 1.442695
        %v681 = vpow.pop %v680
        %v682 = vmul.f32 %v663, 1.442695
        %v683 = vpow.pop %v682
        %v684 = vmul.f32 %v664, 1.442695
        %v685 = vpow.pop %v684
        %v686 = vmul.f32 %v665, 1.442695
        %v687 = vpow.pop %v686
        %v688 = vmul.f32 %v666, 1.442695
        %v689 = vpow.pop %v688
        %v690 = vmul.f32 %v667, 1.442695
        %v691 = vpow.pop %v690
        %v692 = vmul.f32 %v668, 1.442695
        %v693 = vpow.pop %v692
        %v694 = vmul.f32 %v669, 1.442695
        %v695 = vpow.pop %v694
        %v696 = vmul.f32 %v670, 1.442695
        %v697 = vpow.pop %v696
        %v698 = vmul.f32 %v671, 1.442695
        %v699 = vpow.pop %v698
        %v700 = vmul.f32 %v672, 1.442695
        %v701 = vpow.pop %v700
        %v702 = vmul.f32 %v673, 1.442695
        %v703 = vpow.pop %v702
        %v704 = vmul.f32 %v674, 1.442695
        %v705 = vpow.pop %v704
        %v706 = vmul.f32 %v675, 1.442695
        %v707 = vpow.pop %v706
        %v708 = vld [vmem:[#allocation3] sm:$0xff]
        %v709 = vld [vmem:[#allocation3 + $0x8] sm:$0xff]
        %v710 = vadd.f32 %v677, %v679
        %v711 = vadd.f32 %v710, %v681
        %v712 = vadd.f32 %v711, %v683
        %v713 = vadd.f32 %v712, %v685
        %v714 = vadd.f32 %v713, %v687
        %v715 = vadd.f32 %v714, %v689
        %v716 = vadd.f32 %v715, %v691
        %717 = vadd.xlane.f32.xlu0 %v716
        %v718 = vpop.xlane.xlu0 %717
        %v719 = vadd.f32 %v693, %v695
        %v720 = vadd.f32 %v719, %v697
        %v721 = vadd.f32 %v720, %v699
        %v722 = vadd.f32 %v721, %v701
        %v723 = vadd.f32 %v722, %v703
        %v724 = vadd.f32 %v723, %v705
        %v725 = vadd.f32 %v724, %v707
        %726 = vadd.xlane.f32.xlu0 %v725
        %v727 = vpop.xlane.xlu0 %726
        %v728 = vadd.f32 %v708, %v718
        %v729 = vadd.f32 %v709, %v727
        %vm730 = vcmask 7168
        %731 = vst.msk [vmem:[#allocation3] sm:$0xff] %vm730, %v728
        %732 = vst.msk [vmem:[#allocation3 + $0x8] sm:$0xff] %vm730, %v729
        %v733 = vsub.f32 %v419, %v425
        %v734 = vsub.f32 %v421, %v427
        %v735 = vsub.f32 %v496, %v502
        %v736 = vsub.f32 %v498, %v504
        %v737 = vsub.f32 %v573, %v579
        %v738 = vsub.f32 %v575, %v581
        %v739 = vsub.f32 %v650, %v656
        %v740 = vsub.f32 %v652, %v658
        %v741 = vld [vmem:[#allocation4] sm:$0xff]
        %v742 = vmul.f32 %v677, %v733
        %v743 = vmul.f32 %v679, %v734
        %v744 = vmul.f32 %v681, %v735
        %v745 = vmul.f32 %v683, %v736
        %v746 = vmul.f32 %v685, %v737
        %v747 = vmul.f32 %v687, %v738
        %v748 = vmul.f32 %v689, %v739
        %v749 = vmul.f32 %v691, %v740
        %v750 = vadd.f32 %v742, %v743
        %v751 = vadd.f32 %v750, %v744
        %v752 = vadd.f32 %v751, %v745
        %v753 = vadd.f32 %v752, %v746
        %v754 = vadd.f32 %v753, %v747
        %v755 = vadd.f32 %v754, %v748
        %v756 = vadd.f32 %v755, %v749
        %757 = vadd.xlane.f32.xlu0 %v756
        %v758 = vpop.xlane.xlu0 %757
        %v759 = vadd.f32 %v741, %v758
        %760 = vst.msk [vmem:[#allocation4] sm:$0xff] %vm730, %v759
        %p761 = scmp.eq.s32.totalorder %s31, 1
        // Predicated region
        $region41: #{tpu_custom_call.1} parent=27 // pred_check
          %p762 = pneg %p761
        $region42: #{tpu_custom_call.1} parent=27 // pred_check_branch
          %764 = sbr.rel (%p762) target = $region44
        $region43: #{tpu_custom_call.1} parent=27 // pred_region
          %v765 = vld [vmem:[#allocation3] sm:$0xff]
          %v766 = vld [vmem:[#allocation3 + $0x8] sm:$0xff]
          %767 = vst.msk [vmem:[%s252] sm:$0xff] %vm730, %v765
          %v768 = vld [vmem:[#allocation4] sm:$0xff]
          %769 = vst.msk [vmem:[%s259] sm:$0xff] %vm730, %v768
          %770 = vst.msk [vmem:[%s266] sm:$0xff] %vm730, %v766
        $region44: #{tpu_custom_call.1} parent=27 // pred_fallthru
          _
        %s771 = sand.u32 %s97, 1
        %s772 = scalar_lea.sflag [#allocation7], %s771
        %s773 = sand.u32 %s97, 1
        %s774 = smul.addr %s773, 8
        %s775 = scalar_lea.vmem [#allocation10], %s774
        %s776 = sand.u32 %s26, 1
        %s777 = scalar_lea.sflag [#allocation12], %s776
        %s778 = sand.u32 %s123, 1
        %s779 = smul.addr %s778, 8
        %s780 = scalar_lea.vmem [#allocation11], %s779
        %s781 = sand.u32 %s26, 1
        %s782 = scalar_lea.sflag [#allocation12], %s781
        %s783 = sand.u32 %s149, 1
        %s784 = smul.addr %s783, 8
        %s785 = scalar_lea.vmem [#allocation13], %s784
        // Predicated region
        $region45: #{tpu_custom_call.1} parent=27 // pred_check
          %p786 = pneg %p107
        $region46: #{tpu_custom_call.1} parent=27 // pred_check_branch
          %788 = sbr.rel (%p786) target = $region48
        $region47: #{tpu_custom_call.1} parent=27 // pred_region
          %s790 = ssub.s32 128, 128
          %791 = vsyncadd %s772, %s790
          %s792 = smul.addr %s30, 128
          %s793 = scalar_lea.hbm %s2, %s792
          %s795 = sshll.u32 %s775, 4
          %s796 = int_to_ptr.vmem [resolvable:$true] %s795
          %798 = dma.vmem_to_hbm [thread:$0]  %s796, 128, %s793, %s772
        $region48: #{tpu_custom_call.1} parent=27 // pred_fallthru
          _
        // Predicated region
        $region49: #{tpu_custom_call.1} parent=27 // pred_check
          %p799 = pneg %p133
        $region50: #{tpu_custom_call.1} parent=27 // pred_check_branch
          %801 = sbr.rel (%p799) target = $region52
        $region51: #{tpu_custom_call.1} parent=27 // pred_region
          %s803 = ssub.s32 128, 128
          %804 = vsyncadd %s777, %s803
          %s805 = smul.addr %s30, 128
          %s806 = scalar_lea.hbm %s3, %s805
          %s808 = sshll.u32 %s780, 4
          %s809 = int_to_ptr.vmem [resolvable:$true] %s808
          %811 = dma.vmem_to_hbm [thread:$0]  %s809, 128, %s806, %s777
        $region52: #{tpu_custom_call.1} parent=27 // pred_fallthru
          _
        // Predicated region
        $region53: #{tpu_custom_call.1} parent=27 // pred_check
          %p812 = pneg %p159
        $region54: #{tpu_custom_call.1} parent=27 // pred_check_branch
          %814 = sbr.rel (%p812) target = $region56
        $region55: #{tpu_custom_call.1} parent=27 // pred_region
          %s816 = ssub.s32 128, 128
          %817 = vsyncadd %s782, %s816
          %s818 = smul.addr %s30, 128
          %s819 = scalar_lea.hbm %s4, %s818
          %s821 = sshll.u32 %s785, 4
          %s822 = int_to_ptr.vmem [resolvable:$true] %s821
          %824 = dma.vmem_to_hbm [thread:$0]  %s822, 128, %s819, %s782
        $region56: #{tpu_custom_call.1} parent=27 // pred_fallthru
          _
      $region28: #{tpu_custom_call.1} parent=5 // pred_fallthru
        _
      %p825 = scmp.le.s32.totalorder 2, %s21
      // Predicated region
      $region57: #{tpu_custom_call.1} parent=5 // pred_check
        %p826 = pneg %p825
      $region58: #{tpu_custom_call.1} parent=5 // pred_check_branch
        %828 = sbr.rel (%p826) target = $region60
      $region59: #{tpu_custom_call.1} parent=5 // pred_region
        %s829 = ssub.s32 %s21, 2
        // Predicated region
        $region61: #{tpu_custom_call.1} parent=59 // pred_check
          %p830 = pneg %p113
        $region62: #{tpu_custom_call.1} parent=59 // pred_check_branch
          %832 = sbr.rel (%p830) target = $region64
        $region63: #{tpu_custom_call.1} parent=59 // pred_region
          %s833 = sand.u32 %s98, 1
          %s834 = scalar_lea.sflag [#allocation7], %s833
          %s835 = sand.u32 %s98, 1
          %s836 = smul.addr %s835, 8
          %s837 = scalar_lea.vmem [#allocation10], %s836
          %838 = dma.done %s834, 128
        $region64: #{tpu_custom_call.1} parent=59 // pred_fallthru
          _
        // Predicated region
        $region65: #{tpu_custom_call.1} parent=59 // pred_check
          %p839 = pneg %p139
        $region66: #{tpu_custom_call.1} parent=59 // pred_check_branch
          %841 = sbr.rel (%p839) target = $region68
        $region67: #{tpu_custom_call.1} parent=59 // pred_region
          %s842 = sand.u32 %s27, 1
          %s843 = scalar_lea.sflag [#allocation12], %s842
          %s844 = sand.u32 %s124, 1
          %s845 = smul.addr %s844, 8
          %s846 = scalar_lea.vmem [#allocation11], %s845
          %847 = dma.done %s843, 128
        $region68: #{tpu_custom_call.1} parent=59 // pred_fallthru
          _
        // Predicated region
        $region69: #{tpu_custom_call.1} parent=59 // pred_check
          %p848 = pneg %p165
        $region70: #{tpu_custom_call.1} parent=59 // pred_check_branch
          %850 = sbr.rel (%p848) target = $region72
        $region71: #{tpu_custom_call.1} parent=59 // pred_region
          %s851 = sand.u32 %s27, 1
          %s852 = scalar_lea.sflag [#allocation12], %s851
          %s853 = sand.u32 %s150, 1
          %s854 = smul.addr %s853, 8
          %s855 = scalar_lea.vmem [#allocation13], %s854
          %856 = dma.done %s852, 128
        $region72: #{tpu_custom_call.1} parent=59 // pred_fallthru
          _
      $region60: #{tpu_custom_call.1} parent=5 // pred_fallthru
        _
    $region6: #{tpu_custom_call.1} parent=1 // loop_footer
      %s25 = sadd.s32 1, %s21
    $region7: #{tpu_custom_call.1} parent=1 // loop_footer_branch
      %20 = sbr.rel target = $region3
    $region8: #{tpu_custom_call.1} parent=1 // loop_exit
      _
    %857 = vsyncpa [#allocation6], 1
    %s858 = scalar_lea.sflag [#allocation6], 1
    %859 = vsyncpa %s858, 1
    %860 = vsyncpa [#allocation9], 1
    %s861 = scalar_lea.sflag [#allocation9], 1
    %862 = vsyncpa %s861, 1
    %863 = vsyncpa [#allocation7], 1
    %s864 = scalar_lea.sflag [#allocation7], 1
    %865 = vsyncpa %s864, 1
    %866 = vsyncpa [#allocation12], 1
    %s867 = scalar_lea.sflag [#allocation12], 1
    %868 = vsyncpa %s867, 1

</llo_original>
